<compile_context>
chip_gen: v7x
topology: tpu7x:2x2x1
jax: 0.10.0
libtpu: 0.0.40
codegen_flags: <defaults>
</compile_context>

<pallas_src>
import functools

import jax
import jax.numpy as jnp
from jax.experimental import pallas as pl
from jax.experimental.pallas import tpu as pltpu

_HIGHEST = jax.lax.Precision.HIGHEST


def _pool_kernel(h_ref, sel_ref, psum_ref):
    """Grid = (batch_tiles, seq_splits, seq_tiles); last axis is the reduction.

    Pooling runs on the MXU: `sel` is a constant (tb, tb*ts) block selector so
    the per-step partial sum is one 2-D matmul (native dtype in, f32 out),
    keeping VALU/XLU free while the next tile's DMA is in flight.
    """
    s = pl.program_id(2)

    @pl.when(s == 0)
    def _init():
        psum_ref[...] = jnp.zeros_like(psum_ref)

    tb, ts, hidden = h_ref.shape
    x2d = h_ref[...].reshape(tb * ts, hidden)          # ts % 8 == 0 -> layout no-op
    partial = jnp.dot(sel_ref[...], x2d,
                      precision=_HIGHEST,
                      preferred_element_type=jnp.float32)        # (tb, H) f32
    psum_ref[...] += partial.reshape(psum_ref.shape)


def _mlp_kernel(psum_ref, w1_ref, b1_ref, w2_ref, b2_ref, out_ref, *, inv_seq_len):
    """Single-step epilogue: combine seq-split partials, scale to the mean,
    fused two-head MLP ([value | risk] first layer, block-diagonal second)."""
    pooled = jnp.sum(psum_ref[...], axis=0) * inv_seq_len        # (B, H) f32
    h1 = jnp.dot(pooled, w1_ref[...], precision=_HIGHEST,
                 preferred_element_type=jnp.float32) + b1_ref[...]
    h1 = jnp.maximum(h1, 0.0)
    # TODO(synk): dropout is identity (eval-mode semantics); training-mode dropout
    # would need pltpu.prng_seed / prng_random_bits masking here.
    out = jnp.dot(h1, w2_ref[...], precision=_HIGHEST,
                  preferred_element_type=jnp.float32) + b2_ref[...]
    out_ref[...] = out.astype(out_ref.dtype)


def _pick_seq_tile(seq_len, tb, hidden, itemsize, budget_bytes):
    """Largest sublane-aligned divisor of S whose (tb, ts, H) tile fits the
    budget; falls back to the smallest aligned divisor (never silently ignores
    the budget), then to the full extent if S has no aligned divisor."""
    pack = {4: 8, 2: 16, 1: 32}.get(itemsize, 8)   # bf16 packs 2 rows/sublane, int8 packs 4
    row_bytes = max(1, tb * hidden * itemsize)
    max_rows = max(pack, budget_bytes // row_bytes)
    divisors = [d for d in range(pack, seq_len + 1, pack) if seq_len % d == 0]
    fitting = [d for d in divisors if d <= max_rows]
    if fitting:
        return max(fitting)
    if divisors:
        return min(divisors)
    # TODO(synk): pathological S (no multiple-of-`pack` divisor) uses a full-extent
    # seq tile; masked partial tiles would be needed to bound VMEM for huge such S.
    return seq_len


def fuse_params(params):
    """Hoisted parameter fusion (do this once per model, not per call):
    W1 = [w1_val | w1_risk] (H, 2D); W2 block-diagonal (2D, 6)."""
    D = params["w1_val"].shape[1]
    w1 = jnp.concatenate([params["w1_val"], params["w1_risk"]], axis=1)   # (H, 2D)
    b1 = jnp.concatenate([params["b1_val"], params["b1_risk"]], axis=1)   # (1, 2D)
    w2 = jnp.zeros((2 * D, 6), jnp.float32)
    w2 = w2.at[:D, 0:1].set(params["w2_val"])
    w2 = w2.at[D:, 1:6].set(params["w2_risk"])
    b2 = jnp.concatenate([params["b2_val"], params["b2_risk"]], axis=1)   # (1, 6)
    return {"w1": w1, "b1": b1, "w2": w2, "b2": b2}


def financial_analysis_head(hidden_states, fused, *, seq_tile=None,
                            tile_budget_bytes=8 << 20):
    """hidden_states: (B, S, H) f32 or bf16. fused: output of fuse_params."""
    B, S, H = hidden_states.shape
    w1, b1, w2, b2 = fused["w1"], fused["b1"], fused["w2"], fused["b2"]
    two_d = w1.shape[1]
    in_dtype = hidden_states.dtype
    itemsize = jnp.dtype(in_dtype).itemsize

    # ---- tiling ----
    # Output/psum block needs tb % 8 == 0 or tb == B (second-minor block dim rule).
    tb = 8 if (B % 8 == 0 and B >= 8) else B
    # TODO(synk): very large B with B % 8 != 0 falls back to tb == B; masked
    # partial batch tiles would be needed to tile that case.
    nb = B // tb
    ts = seq_tile if seq_tile is not None else _pick_seq_tile(
        S, tb, H, itemsize, tile_budget_bytes)
    assert S % ts == 0, f"seq tile {ts} must divide seq_len {S}"
    ns = S // ts
    # v7x megacore: if the batch axis gives <2 parallel tiles, split the seq
    # reduction into 2 parallel halves (partials combined in the epilogue).
    P = 2 if (nb < 2 and ns >= 2 and ns % 2 == 0) else 1
    ns_p = ns // P

    # Constant block-selector so the pooling partial sum is one MXU matmul.
    sel = (jnp.arange(tb * ts)[None, :] // ts
           == jnp.arange(tb)[:, None]).astype(in_dtype)            # (tb, tb*ts)

    const_sel = lambda b, p, s: (0, 0)

    partials = pl.pallas_call(
        _pool_kernel,
        out_shape=jax.ShapeDtypeStruct((P, B, H), jnp.float32),
        grid=(nb, P, ns_p),
        in_specs=[
            pl.BlockSpec((tb, ts, H), lambda b, p, s: (b, p * ns_p + s, 0)),
            pl.BlockSpec((tb, tb * ts), const_sel),
        ],
        out_specs=pl.BlockSpec((1, tb, H), lambda b, p, s: (p, b, 0)),
        compiler_params=pltpu.CompilerParams(
            dimension_semantics=("parallel", "parallel", "arbitrary"),
            # Explicit limit: covers v5e's 16 MiB default scoped VMEM and stays
            # under v7x's 64 MiB physical; ~2x8 MiB input buffers + small extras.
            vmem_limit_bytes=48 << 20,
        ),
        cost_estimate=pl.CostEstimate(
            flops=int(2 * B * S * H),
            transcendentals=0,
            bytes_accessed=int(B * S * H * itemsize + P * B * H * 4
                               + tb * tb * ts * itemsize),
        ),
    )(hidden_states, sel)

    const1 = lambda i: (0, 0)
    fused_out = pl.pallas_call(
        functools.partial(_mlp_kernel, inv_seq_len=float(1.0 / S)),
        out_shape=jax.ShapeDtypeStruct((B, 6), jnp.float32),
        grid=(1,),
        in_specs=[
            pl.BlockSpec((P, B, H), lambda i: (0, 0, 0)),
            pl.BlockSpec((H, two_d), const1),
            pl.BlockSpec((1, two_d), const1),
            pl.BlockSpec((two_d, 6), const1),
            pl.BlockSpec((1, 6), const1),
        ],
        out_specs=pl.BlockSpec((B, 6), const1),
        compiler_params=pltpu.CompilerParams(
            dimension_semantics=("arbitrary",),
            vmem_limit_bytes=48 << 20,
        ),
    )(partials, w1, b1, w2, b2)

    return {
        "estimated_value": fused_out[:, 0:1],   # (B, 1)
        "risk_logits": fused_out[:, 1:6],       # (B, 5)
    }


def init_params(key, hidden_size, fin_dim):
    """Deterministic synthetic parameter init (shapes from the torch module;
    Linear weights stored transposed: (in_features, out_features))."""
    ks = jax.random.split(key, 8)
    s1 = 1.0 / jnp.sqrt(hidden_size)
    s2 = 1.0 / jnp.sqrt(fin_dim)
    return {
        "w1_val": jax.random.uniform(ks[0], (hidden_size, fin_dim), jnp.float32, -s1, s1),
        "b1_val": jax.random.uniform(ks[1], (1, fin_dim), jnp.float32, -s1, s1),
        "w2_val": jax.random.uniform(ks[2], (fin_dim, 1), jnp.float32, -s2, s2),
        "b2_val": jax.random.uniform(ks[3], (1, 1), jnp.float32, -s2, s2),
        "w1_risk": jax.random.uniform(ks[4], (hidden_size, fin_dim), jnp.float32, -s1, s1),
        "b1_risk": jax.random.uniform(ks[5], (1, fin_dim), jnp.float32, -s1, s1),
        "w2_risk": jax.random.uniform(ks[6], (fin_dim, 5), jnp.float32, -s2, s2),
        "b2_risk": jax.random.uniform(ks[7], (1, 5), jnp.float32, -s2, s2),
    }


def _reference(hidden_states, p):
    pooled = jnp.mean(hidden_states.astype(jnp.float32), axis=1)
    hv = jnp.maximum(jnp.dot(pooled, p["w1_val"], precision=_HIGHEST) + p["b1_val"], 0.0)
    val = jnp.dot(hv, p["w2_val"], precision=_HIGHEST) + p["b2_val"]
    hr = jnp.maximum(jnp.dot(pooled, p["w1_risk"], precision=_HIGHEST) + p["b1_risk"], 0.0)
    risk = jnp.dot(hr, p["w2_risk"], precision=_HIGHEST) + p["b2_risk"]
    return val, risk


if __name__ == "__main__":
    # Small shapes consistent with the module: batch=2, seq=32, hidden=32, fin_dim=64.
    # seq_tile=8 forces 4 seq tiles -> exercises the accumulate path AND the
    # 2-way parallel seq split (P=2) used for v7x's two TensorCores.
    B, S, H, D = 2, 32, 32, 64
    key = jax.random.PRNGKey(0)
    k_x, k_p = jax.random.split(key)

    hidden_states = jax.random.normal(k_x, (B, S, H), jnp.float32)
    params = init_params(k_p, H, D)
    fused = fuse_params(params)   # hoisted: fuse once per model, not per call

    out = financial_analysis_head(hidden_states, fused, seq_tile=8)
    jax.block_until_ready(out)

    ref_val, ref_risk = _reference(hidden_states, params)
    assert out["estimated_value"].shape == (B, 1)
    assert out["risk_logits"].shape == (B, 5)
    assert jnp.allclose(out["estimated_value"], ref_val, atol=5e-3, rtol=5e-3)
    assert jnp.allclose(out["risk_logits"], ref_risk, atol=5e-3, rtol=5e-3)

    # bf16 streaming path (halves HBM bytes; pooling/matmul accumulation stays f32),
    # with auto-picked (16-row aligned) seq tiling.
    out_bf16 = financial_analysis_head(hidden_states.astype(jnp.bfloat16), fused)
    jax.block_until_ready(out_bf16)
    assert jnp.allclose(out_bf16["estimated_value"], ref_val, atol=5e-2, rtol=5e-2)
    assert jnp.allclose(out_bf16["risk_logits"], ref_risk, atol=5e-2, rtol=5e-2)

    print("KERNEL_OK")
</pallas_src>

<mosaic_0001>
module attributes {stable_mosaic.version = 11 : i64} {
  func.func @_pool_kernel(%arg0: i32, %arg1: i32, %arg2: i32, %arg3: memref<2x8x32xf32, #tpu.memory_space<vmem>>, %arg4: memref<2x16xf32, #tpu.memory_space<vmem>>, %arg5: memref<1x2x32xf32, #tpu.memory_space<vmem>>) attributes {dimension_semantics = [#tpu.dimension_semantics<parallel>, #tpu.dimension_semantics<parallel>, #tpu.dimension_semantics<arbitrary>], iteration_bounds = array<i64: 1, 2, 2>, scalar_prefetch = 0 : i64, scratch_operands = 0 : i64, tpu.core_type = #tpu.core_type<tc>, window_params = [{transform_indices = @transform_0, window_bounds = array<i64: 2, 8, 32>}, {pipeline_mode = #tpu.pipeline_mode<synchronous>, transform_indices = @transform_1, window_bounds = array<i64: 2, 16>}, {transform_indices = @transform_2, window_bounds = array<i64: 1, 2, 32>}]} {
    %c0_i32 = arith.constant 0 : i32
    %0 = arith.cmpi eq, %arg2, %c0_i32 : i32
    %1 = arith.extui %0 : i1 to i32
    %c0_i32_0 = arith.constant 0 : i32
    %2 = arith.cmpi ne, %1, %c0_i32_0 : i32
    scf.if %2 {
      %cst_11 = arith.constant 0.000000e+00 : f32
      %11 = vector.broadcast %cst_11 : f32 to vector<1x2x32xf32>
      %c0_12 = arith.constant 0 : index
      %c0_13 = arith.constant 0 : index
      %c0_14 = arith.constant 0 : index
      %12 = vector.load %arg5[%c0_12, %c0_13, %c0_14] : memref<1x2x32xf32, #tpu.memory_space<vmem>>, vector<1x2x32xf32>
      tpu.vector_store %arg5[%c0_12, %c0_13, %c0_14], %11 {strides = array<i32>} : memref<1x2x32xf32, #tpu.memory_space<vmem>>, vector<1x2x32xf32>,
    } else {
    }
    %c0 = arith.constant 0 : index
    %c0_1 = arith.constant 0 : index
    %c0_2 = arith.constant 0 : index
    %3 = vector.load %arg3[%c0, %c0_1, %c0_2] : memref<2x8x32xf32, #tpu.memory_space<vmem>>, vector<2x8x32xf32>
    %4 = vector.shape_cast %3 : vector<2x8x32xf32> to vector<16x32xf32>
    %c0_3 = arith.constant 0 : index
    %c0_4 = arith.constant 0 : index
    %5 = vector.load %arg4[%c0_3, %c0_4] : memref<2x16xf32, #tpu.memory_space<vmem>>, vector<2x16xf32>
    %cst = arith.constant dense<0.000000e+00> : vector<2x32xf32>
    %6 = tpu.matmul %5, %4, %cst {dimension_numbers = #tpu.dot_dimension_numbers<[1], [0], [0], [1], [0, 0, 1, 1], [], []>, precision = #tpu.contract_precision<fp32>} : vector<2x16xf32>, vector<16x32xf32>, vector<2x32xf32> -> vector<2x32xf32>
    %c0_5 = arith.constant 0 : index
    %c0_6 = arith.constant 0 : index
    %c0_7 = arith.constant 0 : index
    %7 = vector.load %arg5[%c0_5, %c0_6, %c0_7] : memref<1x2x32xf32, #tpu.memory_space<vmem>>, vector<1x2x32xf32>
    %8 = vector.shape_cast %6 : vector<2x32xf32> to vector<1x2x32xf32>
    %9 = arith.addf %7, %8 : vector<1x2x32xf32>
    %c0_8 = arith.constant 0 : index
    %c0_9 = arith.constant 0 : index
    %c0_10 = arith.constant 0 : index
    %10 = vector.load %arg5[%c0_8, %c0_9, %c0_10] : memref<1x2x32xf32, #tpu.memory_space<vmem>>, vector<1x2x32xf32>
    tpu.vector_store %arg5[%c0_8, %c0_9, %c0_10], %9 {strides = array<i32>} : memref<1x2x32xf32, #tpu.memory_space<vmem>>, vector<1x2x32xf32>,
    return
  }
  func.func @transform_0(%arg0: i32, %arg1: i32, %arg2: i32) -> (i32, i32, i32) {
    %c2_i32 = arith.constant 2 : i32
    %0 = arith.muli %arg1, %c2_i32 : i32
    %1 = arith.addi %0, %arg2 : i32
    %c0_i32 = arith.constant 0 : i32
    %c0_i32_0 = arith.constant 0 : i32
    return %arg0, %1, %c0_i32 : i32, i32, i32
  }
  func.func @transform_1(%arg0: i32, %arg1: i32, %arg2: i32) -> (i32, i32) {
    %c0_i32 = arith.constant 0 : i32
    %c0_i32_0 = arith.constant 0 : i32
    %c0_i32_1 = arith.constant 0 : i32
    return %c0_i32, %c0_i32_0 : i32, i32
  }
  func.func @transform_2(%arg0: i32, %arg1: i32, %arg2: i32) -> (i32, i32, i32) {
    %c0_i32 = arith.constant 0 : i32
    %c0_i32_0 = arith.constant 0 : i32
    return %arg1, %arg0, %c0_i32 : i32, i32, i32
  }
}

</mosaic_0001>

<llo_original>
// kernel: tpu_custom_call.1
$region0: #{tpu_custom_call.1}
  #allocation0 [shape = 'u32[]', space=smem, size = 0x4, offset = 0x4, fixed_abs, tag = 'smem constant byte address 0x4 - core index']
  #allocation1 [shape = 'u32[144,128]{1,0:T(1,128)}', space=vmem, size = 0x12000, scoped, tag = 'internal scratch']
  %s0 = inlined_call_operand.hbm [shape: f32[2,32,32], index: 0, kind: input, shape index: {}]
  %s1 = inlined_call_operand.vmem [shape: f32[2,16], index: 1, kind: input, shape index: {}]
  %s2 = inlined_call_operand.hbm [shape: f32[2,2,32], index: 2, kind: output, shape index: {}]
  %s3 = sld [smem:[#allocation0]]
  $region49: #{tpu_custom_call.1} parent=0
    _
  %s5 = ssub.s32 1, %s3
  %s6 = scalar_select 0, %s5, %s3
  $region1: #{tpu_custom_call.1} parent=0
    #allocation2 [shape = 'u8[16384]{0}', space=vmem, size = 0x4000, scoped, tag = 'input window, operand 0']
    #allocation3 [shape = 's32[2]{0}', space=sflag, size = 0x8, scoped, tag = 'scoped memory for tpu_custom_call.1']
    #allocation4 [shape = 's32[2]{0}', space=sflag, size = 0x8, scoped, tag = 'scoped memory for tpu_custom_call.1']
    #allocation5 [shape = 'u8[2048]{0}', space=vmem, size = 0x800, scoped, tag = 'output window, operand 0']
    %7 = vsyncpa [#allocation3], 0
    %s8 = scalar_lea.sflag [#allocation3], 1
    %9 = vsyncpa %s8, 0
    %10 = vsyncpa [#allocation4], 0
    %s11 = scalar_lea.sflag [#allocation4], 1
    %12 = vsyncpa %s11, 0
    loop: start=0, step=1, limit=6
    $region2: #{tpu_custom_call.1} parent=1 // loop_pre_header
      _
    $region3: #{tpu_custom_call.1} parent=1 // loop_header
      %s14 = sphi 0, %s18
      %p15 = scmp.ge.s32.totalorder %s14, 6
      %s21 = sphi 0, %s40
      %s22 = sphi 0, %s36
      %s23 = sphi 0, %s32
      %s24 = sphi 0, %s21
      %s25 = sphi 0, %s22
      %s26 = sphi 0, %s23
      %s27 = sphi 0, %s24
      %s28 = sphi 0, %s25
      %s29 = sphi 0, %s26
      %s49 = sphi 0, %s51
      %s52 = sphi 0, %s49
      %s53 = sphi 0, %s52
      %s69 = sphi 0, %s53
      %s73 = sphi 0, %s73
      %s75 = sphi 0, %s73
      %s76 = sphi 0, %s75
      %s90 = sphi 0, %s76
      %s98 = sphi 0, %s100
      %s101 = sphi 0, %s98
      %s102 = sphi 0, %s101
      %s118 = sphi 0, %s102
    $region4: #{tpu_custom_call.1} parent=1 // loop_header_branch
      %17 = sbr.rel (%p15) target = $region8
    $region5: #{tpu_custom_call.1} parent=1 // loop_body
      %s19 = ssub.s32 %s14, 1
      %s20 = ssub.s32 %s14, 2
      %s30 = sadd.s32 1, %s23
      %p31 = scmp.ge.s32.totalorder %s30, 2
      %s32 = scalar_select %p31, 0, %s30
      %s33 = sadd.s32 1, %s22
      %s34 = scalar_select %p31, %s33, %s22
      %p35 = scmp.ge.s32.totalorder %s34, 2
      %s36 = scalar_select %p35, 0, %s34
      %s37 = sadd.s32 1, %s21
      %s38 = scalar_select %p35, %s37, %s21
      %p39 = scmp.ge.s32.totalorder %s38, 1
      %s40 = scalar_select %p39, 0, %s38
      %s41 = smul.u32 %s22, 2
      %s42 = sadd.s32 %s41, %s23
      %s43 = smul.u32 %s36, 2
      %s44 = sadd.s32 %s43, %s32
      %s45 = ssub.s32 %s21, %s40
      %s46 = ssub.s32 %s42, %s44
      %s47 = sor.u32 %s45, %s46
      %p48 = scmp.eq.s32.totalorder %s47, 0
      %s50 = sadd.s32 %s49, 1
      %s51 = scalar_select %p48, %s49, %s50
      %p54 = pneg %p48
      %p55 = scmp.eq.s32.totalorder %s14, 3
      %p56 = por %p54, %p55
      %p57 = scmp.ne.s32.totalorder %s49, %s52
      %p58 = scmp.eq.s32.totalorder %s14, 0
      %p59 = por %p57, %p58
      %p60 = scmp.ne.s32.totalorder %s49, %s52
      %p61 = scmp.eq.s32.totalorder %s19, 3
      %p62 = por %p60, %p61
      %p63 = scmp.ne.s32.totalorder %s52, %s53
      %p64 = scmp.eq.s32.totalorder %s19, 0
      %p65 = por %p63, %p64
      %p66 = scmp.ne.s32.totalorder %s52, %s53
      %p67 = scmp.eq.s32.totalorder %s20, 3
      %p68 = por %p66, %p67
      %p70 = scmp.ne.s32.totalorder %s53, %s69
      %p71 = scmp.eq.s32.totalorder %s20, 0
      %p72 = por %p70, %p71
      %s74 = sadd.s32 %s73, 1
      %p77 = scmp.eq.s32.totalorder %s14, 3
      %p78 = scmp.ne.s32.totalorder %s73, %s75
      %p79 = scmp.eq.s32.totalorder %s14, 0
      %p80 = por %p78, %p79
      %p81 = scmp.ne.s32.totalorder %s73, %s75
      %p82 = scmp.eq.s32.totalorder %s19, 3
      %p83 = por %p81, %p82
      %p84 = scmp.ne.s32.totalorder %s75, %s76
      %p85 = scmp.eq.s32.totalorder %s19, 0
      %p86 = por %p84, %p85
      %p87 = scmp.ne.s32.totalorder %s75, %s76
      %p88 = scmp.eq.s32.totalorder %s20, 3
      %p89 = por %p87, %p88
      %p91 = scmp.ne.s32.totalorder %s76, %s90
      %p92 = scmp.eq.s32.totalorder %s20, 0
      %p93 = por %p91, %p92
      %s94 = ssub.s32 %s22, %s36
      %s95 = ssub.s32 %s21, %s40
      %s96 = sor.u32 %s94, %s95
      %p97 = scmp.eq.s32.totalorder %s96, 0
      %s99 = sadd.s32 %s98, 1
      %s100 = scalar_select %p97, %s98, %s99
      %p103 = pneg %p97
      %p104 = scmp.eq.s32.totalorder %s14, 3
      %p105 = por %p103, %p104
      %p106 = scmp.ne.s32.totalorder %s98, %s101
      %p107 = scmp.eq.s32.totalorder %s14, 0
      %p108 = por %p106, %p107
      %p109 = scmp.ne.s32.totalorder %s98, %s101
      %p110 = scmp.eq.s32.totalorder %s19, 3
      %p111 = por %p109, %p110
      %p112 = scmp.ne.s32.totalorder %s101, %s102
      %p113 = scmp.eq.s32.totalorder %s19, 0
      %p114 = por %p112, %p113
      %p115 = scmp.ne.s32.totalorder %s101, %s102
      %p116 = scmp.eq.s32.totalorder %s20, 3
      %p117 = por %p115, %p116
      %p119 = scmp.ne.s32.totalorder %s102, %s118
      %p120 = scmp.eq.s32.totalorder %s20, 0
      %p121 = por %p119, %p120
      %p122 = scmp.le.s32.totalorder 1, %s14
      %p123 = scmp.lt.s32.totalorder %s14, 5
      %p124 = pnand %p122, %p123
      %p125 = pneg %p124
      // Predicated region
      $region9: #{tpu_custom_call.1} parent=5 // pred_check
        _
      $region10: #{tpu_custom_call.1} parent=5 // pred_check_branch
        %127 = sbr.rel (%p124) target = $region12
      $region11: #{tpu_custom_call.1} parent=5 // pred_region
        %s128 = ssub.s32 %s14, 1
        // Predicated region
        $region13: #{tpu_custom_call.1} parent=11 // pred_check
          %p129 = pneg %p86
        $region14: #{tpu_custom_call.1} parent=11 // pred_check_branch
          %131 = sbr.rel (%p129) target = $region16
        $region15: #{tpu_custom_call.1} parent=11 // pred_region
          _
        $region16: #{tpu_custom_call.1} parent=11 // pred_fallthru
          _
      $region12: #{tpu_custom_call.1} parent=5 // pred_fallthru
        _
      %p132 = scmp.lt.s32.totalorder %s14, 4
      // Predicated region
      $region17: #{tpu_custom_call.1} parent=5 // pred_check
        %p133 = pneg %p132
      $region18: #{tpu_custom_call.1} parent=5 // pred_check_branch
        %135 = sbr.rel (%p133) target = $region20
      $region19: #{tpu_custom_call.1} parent=5 // pred_region
        // Predicated region
        $region21: #{tpu_custom_call.1} parent=19 // pred_check
          %p136 = pneg %p59
        $region22: #{tpu_custom_call.1} parent=19 // pred_check_branch
          %138 = sbr.rel (%p136) target = $region24
        $region23: #{tpu_custom_call.1} parent=19 // pred_region
          %s139 = sand.u32 %s49, 1
          %s140 = scalar_lea.sflag [#allocation3], %s139
          %s141 = sand.u32 %s49, 1
          %s142 = smul.addr %s141, 16
          %s143 = scalar_lea.vmem [#allocation2], %s142
          %s144 = smul.u32 %s22, 2
          %s145 = sadd.s32 %s144, %s23
          %s146 = smul.u32 2, %s21
          %s148 = ssub.s32 256, 256
          %149 = vsyncadd %s140, %s148
          %s150 = smul.addr %s146, 4
          %s151 = sadd.s32 %s145, %s150
          %s152 = smul.addr %s151, 128
          %s153 = scalar_lea.hbm %s0, %s152
          %s154 = sshll.u32 %s143, 4
          %s155 = int_to_ptr.vmem [resolvable:$true] %s154
          %160 = dma.hbm_to_vmem [thread:$0]  %s153, 256, %s155, %s140, 512, 128, 8
        $region24: #{tpu_custom_call.1} parent=19 // pred_fallthru
          _
      $region20: #{tpu_custom_call.1} parent=5 // pred_fallthru
        _
      %p161 = scmp.le.s32.totalorder 1, %s14
      %p162 = scmp.lt.s32.totalorder %s14, 5
      %p163 = pnand %p161, %p162
      %p164 = pneg %p163
      // Predicated region
      $region25: #{tpu_custom_call.1} parent=5 // pred_check
        _
      $region26: #{tpu_custom_call.1} parent=5 // pred_check_branch
        %166 = sbr.rel (%p163) target = $region28
      $region27: #{tpu_custom_call.1} parent=5 // pred_region
        %s167 = ssub.s32 %s14, 1
        %s168 = sand.u32 %s52, 1
        %s169 = scalar_lea.sflag [#allocation3], %s168
        %s170 = sand.u32 %s52, 1
        %s171 = smul.addr %s170, 16
        %s172 = scalar_lea.vmem [#allocation2], %s171
        // Predicated region
        $region29: #{tpu_custom_call.1} parent=27 // pred_check
          %p173 = pneg %p65
        $region30: #{tpu_custom_call.1} parent=27 // pred_check_branch
          %175 = sbr.rel (%p173) target = $region32
        $region31: #{tpu_custom_call.1} parent=27 // pred_region
          %176 = dma.done %s169, 256
        $region32: #{tpu_custom_call.1} parent=27 // pred_fallthru
          _
        %s177 = sand.u32 %s52, 1
        %s178 = scalar_lea.sflag [#allocation3], %s177
        %s179 = sand.u32 %s52, 1
        %s180 = smul.addr %s179, 16
        %s181 = scalar_lea.vmem [#allocation2], %s180
        %p182 = pneg %p65
        %p183 = pneg %p62
        %p184 = pneg %p86
        %p185 = pneg %p83
        %p186 = pneg %p114
        %p187 = pneg %p111
        %s188 = sand.u32 %s101, 1
        %s189 = scalar_lea.sflag [#allocation4], %s188
        %s190 = sand.u32 %s101, 1
        %s191 = smul.addr %s190, 2
        %s192 = scalar_lea.vmem [#allocation5], %s191
        %s193 = smul.u32 %s25, 2
        %s194 = sadd.s32 %s193, %s26
        %s195 = smul.u32 2, %s24
        %p196 = scmp.eq.s32.totalorder %s26, 0
        // Predicated region
        $region33: #{tpu_custom_call.1} parent=27 // pred_check
          %p197 = pneg %p196
        $region34: #{tpu_custom_call.1} parent=27 // pred_check_branch
          %199 = sbr.rel (%p197) target = $region36
        $region35: #{tpu_custom_call.1} parent=27 // pred_region
          %vm200 = vcmask 254976
          %201 = vst.msk [vmem:[%s192] sm:$0x3] %vm200, 0.0
        $region36: #{tpu_custom_call.1} parent=27 // pred_fallthru
          _
        %v202 = vld [vmem:[%s172] sm:$0xff]
        %v203 = vld [vmem:[%s172 + $0x8] sm:$0xff]
        %v204 = vld [vmem:[%s1] sm:$0x3]
        %vm205 = vcmask 130048
        %v207 = vsel %vm205, %v204, 0
        %209 = vmatprep.subr.mxu0 0.0
        %v210 = vand.u32 %v202, 4294901760
        %211 = vmatpush1.msra.mxu0 %v210
        %212 = vmatprep.subr.mxu0 0.0
        %v213 = vand.u32 %v203, 4294901760
        %214 = vmatpush1.msra.mxu0 %v213
        %215 = vmatprep.subr.mxu0 0.0
        %216 = vmatpush1.msra.mxu0 0.0
        %217 = vmatprep.subr.mxu0 0.0
        %218 = vmatpush1.msra.mxu0 0.0
        %219 = vmatprep.subr.mxu0 0.0
        %220 = vmatpush1.msra.mxu0 0.0
        %221 = vmatprep.subr.mxu0 0.0
        %222 = vmatpush1.msra.mxu0 0.0
        %223 = vmatprep.subr.mxu0 0.0
        %224 = vmatpush1.msra.mxu0 0.0
        %225 = vmatprep.subr.mxu0 0.0
        %226 = vmatpush1.msra.mxu0 0.0
        %227 = vmatprep.subr.mxu0 0.0
        %228 = vmatpush1.msra.mxu0 0.0
        %229 = vmatprep.subr.mxu0 0.0
        %230 = vmatpush1.msra.mxu0 0.0
        %231 = vmatprep.subr.mxu0 0.0
        %232 = vmatpush1.msra.mxu0 0.0
        %233 = vmatprep.subr.mxu0 0.0
        %234 = vmatpush1.msra.mxu0 0.0
        %235 = vmatprep.subr.mxu0 0.0
        %236 = vmatpush1.msra.mxu0 0.0
        %237 = vmatprep.subr.mxu0 0.0
        %238 = vmatpush1.msra.mxu0 0.0
        %239 = vmatprep.subr.mxu0 0.0
        %240 = vmatpush1.msra.mxu0 0.0
        %241 = vmatprep.subr.mxu0 0.0
        %242 = vmatpush1.msra.mxu0 0.0
        %243 = vmatprep.subr.mxu0 0.0
        %244 = vmatpush1.msra.mxu0 0.0
        %245 = vmatprep.subr.mxu0 0.0
        %246 = vmatpush1.msra.mxu0 0.0
        %247 = vmatprep.subr.mxu0 0.0
        %248 = vmatpush1.msra.mxu0 0.0
        %249 = vmatprep.subr.mxu0 0.0
        %250 = vmatpush1.msra.mxu0 0.0
        %251 = vmatprep.subr.mxu0 0.0
        %252 = vmatpush1.msra.mxu0 0.0
        %253 = vmatprep.subr.mxu0 0.0
        %254 = vmatpush1.msra.mxu0 0.0
        %255 = vmatprep.subr.mxu0 0.0
        %256 = vmatpush1.msra.mxu0 0.0
        %257 = vmatprep.subr.mxu0 0.0
        %258 = vmatpush1.msra.mxu0 0.0
        %259 = vmatprep.subr.mxu0 0.0
        %260 = vmatpush1.msra.mxu0 0.0
        %261 = vmatprep.subr.mxu0 0.0
        %262 = vmatpush1.msra.mxu0 0.0
        %263 = vmatprep.subr.mxu0 0.0
        %264 = vmatpush1.msra.mxu0 0.0
        %265 = vmatprep.subr.mxu0 0.0
        %266 = vmatpush1.msra.mxu0 0.0
        %267 = vmatprep.subr.mxu0 0.0
        %268 = vmatpush1.msra.mxu0 0.0
        %269 = vmatprep.subr.mxu0 0.0
        %270 = vmatpush1.msra.mxu0 0.0
        %271 = vmatprep.subr.mxu0 0.0
        %272 = vmatpush1.msra.mxu0 0.0
        %273 = vmatprep.subr.mxu0 0.0
        %274 = vmatpush1.msra.mxu0 0.0
        %275 = vmatprep.mubr.f32.mxu0 0.0
        %v276 = vand.u32 %v207, 4294901760
        %v277 = vsub.f32 %v207, %v276
        %v278 = vand.u32 %v277, 4294901760
        %v279 = vsub.f32 %v277, %v278
        %v280 = vand.u32 %v279, 4294901760
        %281 = vmatmul.mubr.f32.gmra.mrb[0].mxu0 %v280
        %v282 = vpop.f32.mrb[0].mxu0
        %v283 = vadd.f32 0.0, %v282
        %v284 = vpop.f32.mrb[0].mxu0
        %285 = vdwg.mxu0
        %286 = vmatprep.subr.mxu0 0.0
        %v287 = vand.u32 %v202, 4294901760
        %v288 = vsub.f32 %v202, %v287
        %v289 = vand.u32 %v288, 4294901760
        %v290 = vsub.f32 %v288, %v289
        %v291 = vand.u32 %v290, 4294901760
        %292 = vmatpush1.msra.mxu0 %v291
        %293 = vmatprep.subr.mxu0 0.0
        %v294 = vand.u32 %v203, 4294901760
        %v295 = vsub.f32 %v203, %v294
        %v296 = vand.u32 %v295, 4294901760
        %v297 = vsub.f32 %v295, %v296
        %v298 = vand.u32 %v297, 4294901760
        %299 = vmatpush1.msra.mxu0 %v298
        %300 = vmatprep.subr.mxu0 0.0
        %301 = vmatpush1.msra.mxu0 0.0
        %302 = vmatprep.subr.mxu0 0.0
        %303 = vmatpush1.msra.mxu0 0.0
        %304 = vmatprep.subr.mxu0 0.0
        %305 = vmatpush1.msra.mxu0 0.0
        %306 = vmatprep.subr.mxu0 0.0
        %307 = vmatpush1.msra.mxu0 0.0
        %308 = vmatprep.subr.mxu0 0.0
        %309 = vmatpush1.msra.mxu0 0.0
        %310 = vmatprep.subr.mxu0 0.0
        %311 = vmatpush1.msra.mxu0 0.0
        %312 = vmatprep.subr.mxu0 0.0
        %313 = vmatpush1.msra.mxu0 0.0
        %314 = vmatprep.subr.mxu0 0.0
        %315 = vmatpush1.msra.mxu0 0.0
        %316 = vmatprep.subr.mxu0 0.0
        %317 = vmatpush1.msra.mxu0 0.0
        %318 = vmatprep.subr.mxu0 0.0
        %319 = vmatpush1.msra.mxu0 0.0
        %320 = vmatprep.subr.mxu0 0.0
        %321 = vmatpush1.msra.mxu0 0.0
        %322 = vmatprep.subr.mxu0 0.0
        %323 = vmatpush1.msra.mxu0 0.0
        %324 = vmatprep.subr.mxu0 0.0
        %325 = vmatpush1.msra.mxu0 0.0
        %326 = vmatprep.subr.mxu0 0.0
        %327 = vmatpush1.msra.mxu0 0.0
        %328 = vmatprep.subr.mxu0 0.0
        %329 = vmatpush1.msra.mxu0 0.0
        %330 = vmatprep.subr.mxu0 0.0
        %331 = vmatpush1.msra.mxu0 0.0
        %332 = vmatprep.subr.mxu0 0.0
        %333 = vmatpush1.msra.mxu0 0.0
        %334 = vmatprep.subr.mxu0 0.0
        %335 = vmatpush1.msra.mxu0 0.0
        %336 = vmatprep.subr.mxu0 0.0
        %337 = vmatpush1.msra.mxu0 0.0
        %338 = vmatprep.subr.mxu0 0.0
        %339 = vmatpush1.msra.mxu0 0.0
        %340 = vmatprep.subr.mxu0 0.0
        %341 = vmatpush1.msra.mxu0 0.0
        %342 = vmatprep.subr.mxu0 0.0
        %343 = vmatpush1.msra.mxu0 0.0
        %344 = vmatprep.subr.mxu0 0.0
        %345 = vmatpush1.msra.mxu0 0.0
        %346 = vmatprep.subr.mxu0 0.0
        %347 = vmatpush1.msra.mxu0 0.0
        %348 = vmatprep.subr.mxu0 0.0
        %349 = vmatpush1.msra.mxu0 0.0
        %350 = vmatprep.subr.mxu0 0.0
        %351 = vmatpush1.msra.mxu0 0.0
        %352 = vmatprep.subr.mxu0 0.0
        %353 = vmatpush1.msra.mxu0 0.0
        %354 = vmatprep.subr.mxu0 0.0
        %355 = vmatpush1.msra.mxu0 0.0
        %356 = vmatprep.subr.mxu0 0.0
        %357 = vmatpush1.msra.mxu0 0.0
        %358 = vmatprep.subr.mxu0 0.0
        %359 = vmatpush1.msra.mxu0 0.0
        %360 = vmatprep.mubr.f32.mxu0 0.0
        %v361 = vand.u32 %v207, 4294901760
        %362 = vmatmul.mubr.f32.gmra.mrb[0].mxu0 %v361
        %v363 = vpop.f32.mrb[0].mxu0
        %v364 = vadd.f32 %v283, %v363
        %v365 = vpop.f32.mrb[0].mxu0
        %366 = vdwg.mxu0
        %367 = vmatprep.subr.mxu0 0.0
        %v368 = vand.u32 %v202, 4294901760
        %v369 = vsub.f32 %v202, %v368
        %370 = vmatpush1.msra.mxu0 %v369
        %371 = vmatprep.subr.mxu0 0.0
        %v372 = vand.u32 %v203, 4294901760
        %v373 = vsub.f32 %v203, %v372
        %374 = vmatpush1.msra.mxu0 %v373
        %375 = vmatprep.subr.mxu0 0.0
        %376 = vmatpush1.msra.mxu0 0.0
        %377 = vmatprep.subr.mxu0 0.0
        %378 = vmatpush1.msra.mxu0 0.0
        %379 = vmatprep.subr.mxu0 0.0
        %380 = vmatpush1.msra.mxu0 0.0
        %381 = vmatprep.subr.mxu0 0.0
        %382 = vmatpush1.msra.mxu0 0.0
        %383 = vmatprep.subr.mxu0 0.0
        %384 = vmatpush1.msra.mxu0 0.0
        %385 = vmatprep.subr.mxu0 0.0
        %386 = vmatpush1.msra.mxu0 0.0
        %387 = vmatprep.subr.mxu0 0.0
        %388 = vmatpush1.msra.mxu0 0.0
        %389 = vmatprep.subr.mxu0 0.0
        %390 = vmatpush1.msra.mxu0 0.0
        %391 = vmatprep.subr.mxu0 0.0
        %392 = vmatpush1.msra.mxu0 0.0
        %393 = vmatprep.subr.mxu0 0.0
        %394 = vmatpush1.msra.mxu0 0.0
        %395 = vmatprep.subr.mxu0 0.0
        %396 = vmatpush1.msra.mxu0 0.0
        %397 = vmatprep.subr.mxu0 0.0
        %398 = vmatpush1.msra.mxu0 0.0
        %399 = vmatprep.subr.mxu0 0.0
        %400 = vmatpush1.msra.mxu0 0.0
        %401 = vmatprep.subr.mxu0 0.0
        %402 = vmatpush1.msra.mxu0 0.0
        %403 = vmatprep.subr.mxu0 0.0
        %404 = vmatpush1.msra.mxu0 0.0
        %405 = vmatprep.subr.mxu0 0.0
        %406 = vmatpush1.msra.mxu0 0.0
        %407 = vmatprep.subr.mxu0 0.0
        %408 = vmatpush1.msra.mxu0 0.0
        %409 = vmatprep.subr.mxu0 0.0
        %410 = vmatpush1.msra.mxu0 0.0
        %411 = vmatprep.subr.mxu0 0.0
        %412 = vmatpush1.msra.mxu0 0.0
        %413 = vmatprep.subr.mxu0 0.0
        %414 = vmatpush1.msra.mxu0 0.0
        %415 = vmatprep.subr.mxu0 0.0
        %416 = vmatpush1.msra.mxu0 0.0
        %417 = vmatprep.subr.mxu0 0.0
        %418 = vmatpush1.msra.mxu0 0.0
        %419 = vmatprep.subr.mxu0 0.0
        %420 = vmatpush1.msra.mxu0 0.0
        %421 = vmatprep.subr.mxu0 0.0
        %422 = vmatpush1.msra.mxu0 0.0
        %423 = vmatprep.subr.mxu0 0.0
        %424 = vmatpush1.msra.mxu0 0.0
        %425 = vmatprep.subr.mxu0 0.0
        %426 = vmatpush1.msra.mxu0 0.0
        %427 = vmatprep.subr.mxu0 0.0
        %428 = vmatpush1.msra.mxu0 0.0
        %429 = vmatprep.subr.mxu0 0.0
        %430 = vmatpush1.msra.mxu0 0.0
        %431 = vmatprep.subr.mxu0 0.0
        %432 = vmatpush1.msra.mxu0 0.0
        %433 = vmatprep.subr.mxu0 0.0
        %434 = vmatpush1.msra.mxu0 0.0
        %435 = vmatprep.mubr.f32.mxu0 0.0
        %v436 = vand.u32 %v207, 4294901760
        %v437 = vsub.f32 %v207, %v436
        %438 = vmatmul.mubr.f32.gmra.mrb[0].mxu0 %v437
        %v439 = vpop.f32.mrb[0].mxu0
        %v440 = vadd.f32 %v364, %v439
        %v441 = vpop.f32.mrb[0].mxu0
        %442 = vdwg.mxu0
        %443 = vmatprep.subr.mxu0 0.0
        %v444 = vand.u32 %v202, 4294901760
        %445 = vmatpush1.msra.mxu0 %v444
        %446 = vmatprep.subr.mxu0 0.0
        %v447 = vand.u32 %v203, 4294901760
        %448 = vmatpush1.msra.mxu0 %v447
        %449 = vmatprep.subr.mxu0 0.0
        %450 = vmatpush1.msra.mxu0 0.0
        %451 = vmatprep.subr.mxu0 0.0
        %452 = vmatpush1.msra.mxu0 0.0
        %453 = vmatprep.subr.mxu0 0.0
        %454 = vmatpush1.msra.mxu0 0.0
        %455 = vmatprep.subr.mxu0 0.0
        %456 = vmatpush1.msra.mxu0 0.0
        %457 = vmatprep.subr.mxu0 0.0
        %458 = vmatpush1.msra.mxu0 0.0
        %459 = vmatprep.subr.mxu0 0.0
        %460 = vmatpush1.msra.mxu0 0.0
        %461 = vmatprep.subr.mxu0 0.0
        %462 = vmatpush1.msra.mxu0 0.0
        %463 = vmatprep.subr.mxu0 0.0
        %464 = vmatpush1.msra.mxu0 0.0
        %465 = vmatprep.subr.mxu0 0.0
        %466 = vmatpush1.msra.mxu0 0.0
        %467 = vmatprep.subr.mxu0 0.0
        %468 = vmatpush1.msra.mxu0 0.0
        %469 = vmatprep.subr.mxu0 0.0
        %470 = vmatpush1.msra.mxu0 0.0
        %471 = vmatprep.subr.mxu0 0.0
        %472 = vmatpush1.msra.mxu0 0.0
        %473 = vmatprep.subr.mxu0 0.0
        %474 = vmatpush1.msra.mxu0 0.0
        %475 = vmatprep.subr.mxu0 0.0
        %476 = vmatpush1.msra.mxu0 0.0
        %477 = vmatprep.subr.mxu0 0.0
        %478 = vmatpush1.msra.mxu0 0.0
        %479 = vmatprep.subr.mxu0 0.0
        %480 = vmatpush1.msra.mxu0 0.0
        %481 = vmatprep.subr.mxu0 0.0
        %482 = vmatpush1.msra.mxu0 0.0
        %483 = vmatprep.subr.mxu0 0.0
        %484 = vmatpush1.msra.mxu0 0.0
        %485 = vmatprep.subr.mxu0 0.0
        %486 = vmatpush1.msra.mxu0 0.0
        %487 = vmatprep.subr.mxu0 0.0
        %488 = vmatpush1.msra.mxu0 0.0
        %489 = vmatprep.subr.mxu0 0.0
        %490 = vmatpush1.msra.mxu0 0.0
        %491 = vmatprep.subr.mxu0 0.0
        %492 = vmatpush1.msra.mxu0 0.0
        %493 = vmatprep.subr.mxu0 0.0
        %494 = vmatpush1.msra.mxu0 0.0
        %495 = vmatprep.subr.mxu0 0.0
        %496 = vmatpush1.msra.mxu0 0.0
        %497 = vmatprep.subr.mxu0 0.0
        %498 = vmatpush1.msra.mxu0 0.0
        %499 = vmatprep.subr.mxu0 0.0
        %500 = vmatpush1.msra.mxu0 0.0
        %501 = vmatprep.subr.mxu0 0.0
        %502 = vmatpush1.msra.mxu0 0.0
        %503 = vmatprep.subr.mxu0 0.0
        %504 = vmatpush1.msra.mxu0 0.0
        %505 = vmatprep.subr.mxu0 0.0
        %506 = vmatpush1.msra.mxu0 0.0
        %507 = vmatprep.subr.mxu0 0.0
        %508 = vmatpush1.msra.mxu0 0.0
        %509 = vmatprep.mubr.f32.mxu0 0.0
        %v510 = vand.u32 %v207, 4294901760
        %v511 = vsub.f32 %v207, %v510
        %v512 = vand.u32 %v511, 4294901760
        %513 = vmatmul.mubr.f32.gmra.mrb[0].mxu0 %v512
        %v514 = vpop.f32.mrb[0].mxu0
        %v515 = vadd.f32 %v440, %v514
        %v516 = vpop.f32.mrb[0].mxu0
        %517 = vdwg.mxu0
        %518 = vmatprep.subr.mxu0 0.0
        %v519 = vand.u32 %v202, 4294901760
        %v520 = vsub.f32 %v202, %v519
        %v521 = vand.u32 %v520, 4294901760
        %522 = vmatpush1.msra.mxu0 %v521
        %523 = vmatprep.subr.mxu0 0.0
        %v524 = vand.u32 %v203, 4294901760
        %v525 = vsub.f32 %v203, %v524
        %v526 = vand.u32 %v525, 4294901760
        %527 = vmatpush1.msra.mxu0 %v526
        %528 = vmatprep.subr.mxu0 0.0
        %529 = vmatpush1.msra.mxu0 0.0
        %530 = vmatprep.subr.mxu0 0.0
        %531 = vmatpush1.msra.mxu0 0.0
        %532 = vmatprep.subr.mxu0 0.0
        %533 = vmatpush1.msra.mxu0 0.0
        %534 = vmatprep.subr.mxu0 0.0
        %535 = vmatpush1.msra.mxu0 0.0
        %536 = vmatprep.subr.mxu0 0.0
        %537 = vmatpush1.msra.mxu0 0.0
        %538 = vmatprep.subr.mxu0 0.0
        %539 = vmatpush1.msra.mxu0 0.0
        %540 = vmatprep.subr.mxu0 0.0
        %541 = vmatpush1.msra.mxu0 0.0
        %542 = vmatprep.subr.mxu0 0.0
        %543 = vmatpush1.msra.mxu0 0.0
        %544 = vmatprep.subr.mxu0 0.0
        %545 = vmatpush1.msra.mxu0 0.0
        %546 = vmatprep.subr.mxu0 0.0
        %547 = vmatpush1.msra.mxu0 0.0
        %548 = vmatprep.subr.mxu0 0.0
        %549 = vmatpush1.msra.mxu0 0.0
        %550 = vmatprep.subr.mxu0 0.0
        %551 = vmatpush1.msra.mxu0 0.0
        %552 = vmatprep.subr.mxu0 0.0
        %553 = vmatpush1.msra.mxu0 0.0
        %554 = vmatprep.subr.mxu0 0.0
        %555 = vmatpush1.msra.mxu0 0.0
        %556 = vmatprep.subr.mxu0 0.0
        %557 = vmatpush1.msra.mxu0 0.0
        %558 = vmatprep.subr.mxu0 0.0
        %559 = vmatpush1.msra.mxu0 0.0
        %560 = vmatprep.subr.mxu0 0.0
        %561 = vmatpush1.msra.mxu0 0.0
        %562 = vmatprep.subr.mxu0 0.0
        %563 = vmatpush1.msra.mxu0 0.0
        %564 = vmatprep.subr.mxu0 0.0
        %565 = vmatpush1.msra.mxu0 0.0
        %566 = vmatprep.subr.mxu0 0.0
        %567 = vmatpush1.msra.mxu0 0.0
        %568 = vmatprep.subr.mxu0 0.0
        %569 = vmatpush1.msra.mxu0 0.0
        %570 = vmatprep.subr.mxu0 0.0
        %571 = vmatpush1.msra.mxu0 0.0
        %572 = vmatprep.subr.mxu0 0.0
        %573 = vmatpush1.msra.mxu0 0.0
        %574 = vmatprep.subr.mxu0 0.0
        %575 = vmatpush1.msra.mxu0 0.0
        %576 = vmatprep.subr.mxu0 0.0
        %577 = vmatpush1.msra.mxu0 0.0
        %578 = vmatprep.subr.mxu0 0.0
        %579 = vmatpush1.msra.mxu0 0.0
        %580 = vmatprep.subr.mxu0 0.0
        %581 = vmatpush1.msra.mxu0 0.0
        %582 = vmatprep.subr.mxu0 0.0
        %583 = vmatpush1.msra.mxu0 0.0
        %584 = vmatprep.subr.mxu0 0.0
        %585 = vmatpush1.msra.mxu0 0.0
        %586 = vmatprep.subr.mxu0 0.0
        %587 = vmatpush1.msra.mxu0 0.0
        %588 = vmatprep.mubr.f32.mxu0 0.0
        %v589 = vand.u32 %v207, 4294901760
        %590 = vmatmul.mubr.f32.gmra.mrb[0].mxu0 %v589
        %v591 = vpop.f32.mrb[0].mxu0
        %v592 = vadd.f32 %v515, %v591
        %v593 = vpop.f32.mrb[0].mxu0
        %594 = vdwg.mxu0
        %595 = vmatprep.subr.mxu0 0.0
        %v596 = vand.u32 %v202, 4294901760
        %597 = vmatpush1.msra.mxu0 %v596
        %598 = vmatprep.subr.mxu0 0.0
        %v599 = vand.u32 %v203, 4294901760
        %600 = vmatpush1.msra.mxu0 %v599
        %601 = vmatprep.subr.mxu0 0.0
        %602 = vmatpush1.msra.mxu0 0.0
        %603 = vmatprep.subr.mxu0 0.0
        %604 = vmatpush1.msra.mxu0 0.0
        %605 = vmatprep.subr.mxu0 0.0
        %606 = vmatpush1.msra.mxu0 0.0
        %607 = vmatprep.subr.mxu0 0.0
        %608 = vmatpush1.msra.mxu0 0.0
        %609 = vmatprep.subr.mxu0 0.0
        %610 = vmatpush1.msra.mxu0 0.0
        %611 = vmatprep.subr.mxu0 0.0
        %612 = vmatpush1.msra.mxu0 0.0
        %613 = vmatprep.subr.mxu0 0.0
        %614 = vmatpush1.msra.mxu0 0.0
        %615 = vmatprep.subr.mxu0 0.0
        %616 = vmatpush1.msra.mxu0 0.0
        %617 = vmatprep.subr.mxu0 0.0
        %618 = vmatpush1.msra.mxu0 0.0
        %619 = vmatprep.subr.mxu0 0.0
        %620 = vmatpush1.msra.mxu0 0.0
        %621 = vmatprep.subr.mxu0 0.0
        %622 = vmatpush1.msra.mxu0 0.0
        %623 = vmatprep.subr.mxu0 0.0
        %624 = vmatpush1.msra.mxu0 0.0
        %625 = vmatprep.subr.mxu0 0.0
        %626 = vmatpush1.msra.mxu0 0.0
        %627 = vmatprep.subr.mxu0 0.0
        %628 = vmatpush1.msra.mxu0 0.0
        %629 = vmatprep.subr.mxu0 0.0
        %630 = vmatpush1.msra.mxu0 0.0
        %631 = vmatprep.subr.mxu0 0.0
        %632 = vmatpush1.msra.mxu0 0.0
        %633 = vmatprep.subr.mxu0 0.0
        %634 = vmatpush1.msra.mxu0 0.0
        %635 = vmatprep.subr.mxu0 0.0
        %636 = vmatpush1.msra.mxu0 0.0
        %637 = vmatprep.subr.mxu0 0.0
        %638 = vmatpush1.msra.mxu0 0.0
        %639 = vmatprep.subr.mxu0 0.0
        %640 = vmatpush1.msra.mxu0 0.0
        %641 = vmatprep.subr.mxu0 0.0
        %642 = vmatpush1.msra.mxu0 0.0
        %643 = vmatprep.subr.mxu0 0.0
        %644 = vmatpush1.msra.mxu0 0.0
        %645 = vmatprep.subr.mxu0 0.0
        %646 = vmatpush1.msra.mxu0 0.0
        %647 = vmatprep.subr.mxu0 0.0
        %648 = vmatpush1.msra.mxu0 0.0
        %649 = vmatprep.subr.mxu0 0.0
        %650 = vmatpush1.msra.mxu0 0.0
        %651 = vmatprep.subr.mxu0 0.0
        %652 = vmatpush1.msra.mxu0 0.0
        %653 = vmatprep.subr.mxu0 0.0
        %654 = vmatpush1.msra.mxu0 0.0
        %655 = vmatprep.subr.mxu0 0.0
        %656 = vmatpush1.msra.mxu0 0.0
        %657 = vmatprep.subr.mxu0 0.0
        %658 = vmatpush1.msra.mxu0 0.0
        %659 = vmatprep.subr.mxu0 0.0
        %660 = vmatpush1.msra.mxu0 0.0
        %661 = vmatprep.mubr.f32.mxu0 0.0
        %v662 = vand.u32 %v207, 4294901760
        %663 = vmatmul.mubr.f32.gmra.mrb[0].mxu0 %v662
        %v664 = vpop.f32.mrb[0].mxu0
        %v665 = vadd.f32 %v592, %v664
        %v666 = vpop.f32.mrb[0].mxu0
        %667 = vdwg.mxu0
        %v668 = vld [vmem:[%s192] sm:$0x3]
        %v669 = vadd.f32 %v668, %v665
        %vm670 = vcmask 254976
        %671 = vst.msk [vmem:[%s192] sm:$0x3] %vm670, %v669
        %s672 = sand.u32 %s101, 1
        %s673 = scalar_lea.sflag [#allocation4], %s672
        %s674 = sand.u32 %s101, 1
        %s675 = smul.addr %s674, 2
        %s676 = scalar_lea.vmem [#allocation5], %s675
        // Predicated region
        $region37: #{tpu_custom_call.1} parent=27 // pred_check
          %p677 = pneg %p111
        $region38: #{tpu_custom_call.1} parent=27 // pred_check_branch
          %679 = sbr.rel (%p677) target = $region40
        $region39: #{tpu_custom_call.1} parent=27 // pred_region
          %s681 = ssub.s32 32, 32
          %682 = vsyncadd %s673, %s681
          %s683 = sadd.s32 %s24, %s25
          %s684 = smul.addr %s683, 32
          %s685 = scalar_lea.hbm %s2, %s684
          %s687 = sshll.u32 %s676, 4
          %s688 = int_to_ptr.vmem [resolvable:$true] %s687
          %690 = dma.vmem_to_hbm [thread:$0]  %s688, 32, %s685, %s673
        $region40: #{tpu_custom_call.1} parent=27 // pred_fallthru
          _
      $region28: #{tpu_custom_call.1} parent=5 // pred_fallthru
        _
      %p691 = scmp.le.s32.totalorder 2, %s14
      // Predicated region
      $region41: #{tpu_custom_call.1} parent=5 // pred_check
        %p692 = pneg %p691
      $region42: #{tpu_custom_call.1} parent=5 // pred_check_branch
        %694 = sbr.rel (%p692) target = $region44
      $region43: #{tpu_custom_call.1} parent=5 // pred_region
        %s695 = ssub.s32 %s14, 2
        // Predicated region
        $region45: #{tpu_custom_call.1} parent=43 // pred_check
          %p696 = pneg %p117
        $region46: #{tpu_custom_call.1} parent=43 // pred_check_branch
          %698 = sbr.rel (%p696) target = $region48
        $region47: #{tpu_custom_call.1} parent=43 // pred_region
          %s699 = sand.u32 %s102, 1
          %s700 = scalar_lea.sflag [#allocation4], %s699
          %s701 = sand.u32 %s102, 1
          %s702 = smul.addr %s701, 2
          %s703 = scalar_lea.vmem [#allocation5], %s702
          %704 = dma.done %s700, 32
        $region48: #{tpu_custom_call.1} parent=43 // pred_fallthru
          _
      $region44: #{tpu_custom_call.1} parent=5 // pred_fallthru
        _
    $region6: #{tpu_custom_call.1} parent=1 // loop_footer
      %s18 = sadd.s32 1, %s14
    $region7: #{tpu_custom_call.1} parent=1 // loop_footer_branch
      %13 = sbr.rel target = $region3
    $region8: #{tpu_custom_call.1} parent=1 // loop_exit
      _
    %705 = vsyncpa [#allocation3], 1
    %s706 = scalar_lea.sflag [#allocation3], 1
    %707 = vsyncpa %s706, 1
    %708 = vsyncpa [#allocation4], 1
    %s709 = scalar_lea.sflag [#allocation4], 1
    %710 = vsyncpa %s709, 1

</llo_original>
